<compile_context>
chip_gen: v7x
topology: tpu7x:2x2x1
jax: 0.10.0
libtpu: 0.0.40
codegen_flags: <defaults>
</compile_context>

<pallas_src>
import math

import jax
import jax.numpy as jnp
from jax.experimental import pallas as pl
from jax.experimental.pallas import tpu as pltpu


_INV_SQRT2 = 0.7071067811865476
_SQRT_2_OVER_PI = 0.7978845608028654


def _apply_act(y, act, approximate_gelu):
    """Activation epilogue in f32."""
    if act is None:
        return y
    a = act.lower()
    if a == "gelu":
        if approximate_gelu:
            # tanh form -> EUP slot (nearly free next to DMA/stores on v7x).
            return 0.5 * y * (1.0 + jnp.tanh(_SQRT_2_OVER_PI * (y + 0.044715 * y * y * y)))
        # exact erf form (matches torch.nn.GELU default)
        return 0.5 * y * (1.0 + jax.lax.erf(y * _INV_SQRT2))
    if a in ("swish", "silu"):
        return y * jax.nn.sigmoid(y)
    raise ValueError(f"unsupported act_func: {act}")


def _tpu_vmem_capacity_bytes(default=64 << 20):
    try:
        info = pltpu.get_tpu_info()
        cap = getattr(info, "vmem_capacity_bytes", None)
        if cap:
            return int(cap)
    except Exception:
        pass
    return default


def _pick_k_tile(c_in, max_tk=512):
    """Contraction tile for the 1x1 path. Must be a multiple of 128 (weight lane
    dim) or the full C_in extent."""
    if c_in <= max_tk:
        return c_in
    for tk in (512, 384, 256, 128):
        if c_in % tk == 0:
            return tk
    return c_in  # full-K fallback (still correct; T shrinks via the budget)


def _pick_spatial_tile(hw, tk, c_out, *, budget_bytes, max_tile=2048):
    """Largest lane-dense (multiple-of-128) spatial tile within the VMEM budget,
    with the ragged tail balanced so the last tile is not a tiny masked stub."""

    def working_set(t):
        feats = 2 * tk * t          # double-buffered feature block
        outb = 2 * c_out * t        # double-buffered output block
        acc = c_out * t             # f32 accumulator scratch
        wgt = 2 * c_out * tk        # weight block, counted double-buffered
        return 4 * (feats + outb + acc + wgt + 2 * c_out)

    if hw <= 128:
        return hw                   # full-extent block (always legal)
    t = max((min(hw, max_tile) // 128) * 128, 128)
    while t > 128 and working_set(t) > budget_bytes:
        t -= 128
    # Balance the ragged tail (e.g. HW=1000 -> 512+488 instead of 896+104).
    n = -(-hw // t)
    t_bal = ((-(-hw // n) + 127) // 128) * 128
    return max(min(t, t_bal), 128)


def conv_block(x, weight, bias, *, padding=0, act="gelu", approximate_gelu=False,
               compute_dtype=None, max_tile=2048):
    """ConvBlock forward: Conv2d (stride 1) + activation.

    x:      (N, C_in, H, W)        NCHW (PyTorch layout)
    weight: (C_out, C_in, kh, kw)  PyTorch Conv2d layout
    bias:   (C_out,)
    returns (N, C_out, Ho, Wo)     NCHW
    """
    N, C_in, H, W = x.shape
    C_out, C_in_w, kh, kw = weight.shape
    assert C_in_w == C_in

    vmem_cap = _tpu_vmem_capacity_bytes()
    vmem_limit = int(min(vmem_cap * 3 // 4, 100 << 20))      # 48 MiB (v7x) / 96 MiB (v5e/v6e)
    budget = max(16 << 20, vmem_cap // 2 - (4 << 20))        # headroom for compiler temporaries

    out_dtype = x.dtype
    b_col = bias.reshape(C_out, 1).astype(jnp.float32)

    # ---------------- fast path: 1x1 conv, no padding (module default) -------
    if kh == 1 and kw == 1 and padding == 0:
        HW = H * W
        feats = x.reshape(N, C_in, HW)                       # free reshape
        w_mat = weight.reshape(C_out, C_in)
        if compute_dtype is not None:                        # opt-in bf16 (numerics-changing)
            feats = feats.astype(compute_dtype)
            w_mat = w_mat.astype(compute_dtype)

        tk = _pick_k_tile(C_in)
        T = _pick_spatial_tile(HW, tk, C_out, budget_bytes=budget, max_tile=max_tile)
        n_k = C_in // tk
        grid = (N, -(-HW // T), n_k)

        def kernel_1x1(x_ref, w_ref, b_ref, o_ref, acc_ref):
            # x_ref: (tk, T)  w_ref: (C_out, tk)  b_ref: (C_out, 1)
            # o_ref: (C_out, T) lane-dense  acc_ref: (C_out, T) f32
            @pl.when(pl.program_id(2) == 0)
            def _():
                acc_ref[...] = jnp.zeros_like(acc_ref)

            acc_ref[...] += jnp.dot(w_ref[...], x_ref[...],
                                    preferred_element_type=jnp.float32)

            @pl.when(pl.program_id(2) == pl.num_programs(2) - 1)
            def _():
                y = acc_ref[...] + b_ref[...]
                o_ref[...] = _apply_act(y, act, approximate_gelu).astype(o_ref.dtype)

        out = pl.pallas_call(
            kernel_1x1,
            out_shape=jax.ShapeDtypeStruct((N, C_out, HW), out_dtype),
            grid_spec=pltpu.PrefetchScalarGridSpec(
                num_scalar_prefetch=0,
                grid=grid,
                in_specs=[
                    pl.BlockSpec((None, tk, T), lambda n, s, k: (n, k, s)),   # features
                    pl.BlockSpec((C_out, tk), lambda n, s, k: (0, k)),        # weight
                    pl.BlockSpec((C_out, 1), lambda n, s, k: (0, 0)),         # bias (resident)
                ],
                out_specs=pl.BlockSpec((None, C_out, T), lambda n, s, k: (n, 0, s)),
                scratch_shapes=[pltpu.VMEM((C_out, T), jnp.float32)],
            ),
            compiler_params=pltpu.CompilerParams(
                dimension_semantics=("parallel", "parallel", "arbitrary"),
                vmem_limit_bytes=vmem_limit,
            ),
        )(feats, w_mat, b_col)
        return out.reshape(N, C_out, H, W)

    # ---------------- general path: kxk conv, in-kernel tap loop -------------
    Hp, Wp = H + 2 * padding, W + 2 * padding
    Ho, Wo = Hp - kh + 1, Wp - kw + 1
    L = Ho * Wp      # accumulate over full padded rows; columns >= Wo sliced off on host

    xp = x if padding == 0 else jnp.pad(
        x, ((0, 0), (0, 0), (padding, padding), (padding, padding)))
    xflat = xp.reshape(N, C_in, Hp * Wp)                     # free reshape
    if kw > 1:
        xflat = jnp.pad(xflat, ((0, 0), (0, 0), (0, kw - 1)))  # keep last-tap slice in-bounds
    Lp = xflat.shape[-1]

    # (C_out, C_in, kh, kw) -> (kh*kw, C_out, C_in): one (C_out, C_in) matrix per tap.
    w_taps = jnp.transpose(weight, (2, 3, 0, 1)).reshape(kh * kw, C_out, C_in)
    if compute_dtype is not None:
        xflat = xflat.astype(compute_dtype)
        w_taps = w_taps.astype(compute_dtype)

    # Tile C_out so big channel counts don't blow VMEM; full extent when small.
    tc = C_out if (C_out <= 256 or C_out % 8 != 0) else 256
    n_c = -(-C_out // tc)
    grid = (N, n_c)

    # TODO(synk): for very large images/channel counts, halo-tile the spatial dims
    # (overlapping row windows need manual make_async_copy DMA) instead of one
    # full-spatial input block per sample.

    def kernel_kxk(x_ref, w_ref, b_ref, o_ref):
        # x_ref: (C_in, Lp)  w_ref: (kh*kw, tc, C_in)  b_ref: (tc, 1)  o_ref: (tc, L)
        acc = None
        for i in range(kh):
            for j in range(kw):
                off = i * Wp + j                              # static offset
                win = x_ref[:, off:off + L]                   # (C_in, L), VMEM-local slice
                part = jnp.dot(w_ref[i * kw + j], win,
                               preferred_element_type=jnp.float32)
                acc = part if acc is None else acc + part
        y = acc + b_ref[...]
        o_ref[...] = _apply_act(y, act, approximate_gelu).astype(o_ref.dtype)

    out = pl.pallas_call(
        kernel_kxk,
        out_shape=jax.ShapeDtypeStruct((N, C_out, L), out_dtype),
        grid_spec=pltpu.PrefetchScalarGridSpec(
            num_scalar_prefetch=0,
            grid=grid,
            in_specs=[
                pl.BlockSpec((None, C_in, Lp), lambda n, c: (n, 0, 0)),        # padded sample
                pl.BlockSpec((kh * kw, tc, C_in), lambda n, c: (0, c, 0)),     # weights
                pl.BlockSpec((tc, 1), lambda n, c: (c, 0)),                    # bias
            ],
            out_specs=pl.BlockSpec((None, tc, L), lambda n, c: (n, c, 0)),
        ),
        compiler_params=pltpu.CompilerParams(
            dimension_semantics=("parallel", "parallel"),
            vmem_limit_bytes=vmem_limit,
        ),
    )(xflat, w_taps, b_col)

    # Drop the (Wp - Wo) garbage columns per output row (cheap XLA slice).
    return out.reshape(N, C_out, Ho, Wp)[:, :, :, :Wo]


def _reference(x, weight, bias, padding):
    y = jax.lax.conv_general_dilated(
        x, weight, window_strides=(1, 1),
        padding=[(padding, padding), (padding, padding)],
        dimension_numbers=("NCHW", "OIHW", "NCHW"),
    ) + bias.reshape(1, -1, 1, 1)
    return jax.nn.gelu(y, approximate=False)


if __name__ == "__main__":
    key = jax.random.PRNGKey(0)
    N, C_in, H, W, C_out = 2, 4, 16, 16, 8

    # --- module defaults: kernel_size=1, padding=0, GELU ---
    kh1 = kw1 = 1
    padding1 = 0
    kx, kwt, kbt = jax.random.split(key, 3)
    bound1 = 1.0 / math.sqrt(C_in * kh1 * kw1)
    x = jax.random.normal(kx, (N, C_in, H, W), dtype=jnp.float32)
    w1 = jax.random.uniform(kwt, (C_out, C_in, kh1, kw1), jnp.float32, -bound1, bound1)
    b1 = jax.random.uniform(kbt, (C_out,), jnp.float32, -bound1, bound1)

    y1 = jax.block_until_ready(conv_block(x, w1, b1, padding=padding1))
    y1_ref = _reference(x, w1, b1, padding1)
    assert y1.shape == y1_ref.shape, (y1.shape, y1_ref.shape)
    assert jnp.allclose(y1, y1_ref, atol=2e-5, rtol=2e-5), "mismatch vs reference (1x1)"

    # --- general path: kernel_size=3, padding=1 ---
    kh2 = kw2 = 3
    padding2 = 1
    k2w, k2b = jax.random.split(jax.random.PRNGKey(1), 2)
    bound2 = 1.0 / math.sqrt(C_in * kh2 * kw2)
    w2 = jax.random.uniform(k2w, (C_out, C_in, kh2, kw2), jnp.float32, -bound2, bound2)
    b2 = jax.random.uniform(k2b, (C_out,), jnp.float32, -bound2, bound2)

    y2 = jax.block_until_ready(conv_block(x, w2, b2, padding=padding2))
    y2_ref = _reference(x, w2, b2, padding2)
    assert y2.shape == y2_ref.shape, (y2.shape, y2_ref.shape)
    assert jnp.allclose(y2, y2_ref, atol=2e-5, rtol=2e-5), "mismatch vs reference (3x3)"

    print("KERNEL_OK")
</pallas_src>

<mosaic_0001>
module attributes {stable_mosaic.version = 11 : i64} {
  func.func @kernel_1x1(%arg0: i32, %arg1: i32, %arg2: i32, %arg3: memref<1x4x256xf32, #tpu.memory_space<vmem>>, %arg4: memref<8x4xf32, #tpu.memory_space<vmem>>, %arg5: memref<8x1xf32, #tpu.memory_space<vmem>>, %arg6: memref<1x8x256xf32, #tpu.memory_space<vmem>>, %arg7: memref<8x256xf32, #tpu.memory_space<vmem>>) attributes {dimension_semantics = [#tpu.dimension_semantics<parallel>, #tpu.dimension_semantics<parallel>, #tpu.dimension_semantics<arbitrary>], iteration_bounds = array<i64: 2, 1, 1>, scalar_prefetch = 0 : i64, scratch_operands = 1 : i64, tpu.core_type = #tpu.core_type<tc>, window_params = [{transform_indices = @transform_0, window_bounds = array<i64: 1, 4, 256>}, {transform_indices = @transform_1, window_bounds = array<i64: 8, 4>}, {pipeline_mode = #tpu.pipeline_mode<synchronous>, transform_indices = @transform_2, window_bounds = array<i64: 8, 1>}, {transform_indices = @transform_3, window_bounds = array<i64: 1, 8, 256>}]} {
    %c0_i32 = arith.constant 0 : i32
    %0 = arith.cmpi eq, %arg2, %c0_i32 : i32
    %1 = arith.extui %0 : i1 to i32
    %c0_i32_0 = arith.constant 0 : i32
    %2 = arith.cmpi ne, %1, %c0_i32_0 : i32
    scf.if %2 {
      %cst_11 = arith.constant 0.000000e+00 : f32
      %13 = vector.broadcast %cst_11 : f32 to vector<8x256xf32>
      %c0_12 = arith.constant 0 : index
      %c0_13 = arith.constant 0 : index
      %14 = vector.load %arg7[%c0_12, %c0_13] : memref<8x256xf32, #tpu.memory_space<vmem>>, vector<8x256xf32>
      tpu.vector_store %arg7[%c0_12, %c0_13], %13 {strides = array<i32>} : memref<8x256xf32, #tpu.memory_space<vmem>>, vector<8x256xf32>,
    } else {
    }
    %c0 = arith.constant 0 : index
    %c0_1 = arith.constant 0 : index
    %3 = vector.load %arg7[%c0, %c0_1] : memref<8x256xf32, #tpu.memory_space<vmem>>, vector<8x256xf32>
    %c0_2 = arith.constant 0 : index
    %c0_3 = arith.constant 0 : index
    %4 = vector.load %arg4[%c0_2, %c0_3] : memref<8x4xf32, #tpu.memory_space<vmem>>, vector<8x4xf32>
    %c0_4 = arith.constant 0 : index
    %c0_5 = arith.constant 0 : index
    %c0_6 = arith.constant 0 : index
    %5 = vector.load %arg3[%c0_4, %c0_5, %c0_6] : memref<1x4x256xf32, #tpu.memory_space<vmem>>, vector<1x4x256xf32>
    %6 = vector.shape_cast %5 : vector<1x4x256xf32> to vector<4x256xf32>
    %cst = arith.constant dense<0.000000e+00> : vector<8x256xf32>
    %7 = tpu.matmul %4, %6, %cst {dimension_numbers = #tpu.dot_dimension_numbers<[1], [0], [0], [1], [0, 0, 1, 1], [], []>} : vector<8x4xf32>, vector<4x256xf32>, vector<8x256xf32> -> vector<8x256xf32>
    %8 = arith.addf %3, %7 : vector<8x256xf32>
    %c0_7 = arith.constant 0 : index
    %c0_8 = arith.constant 0 : index
    %9 = vector.load %arg7[%c0_7, %c0_8] : memref<8x256xf32, #tpu.memory_space<vmem>>, vector<8x256xf32>
    tpu.vector_store %arg7[%c0_7, %c0_8], %8 {strides = array<i32>} : memref<8x256xf32, #tpu.memory_space<vmem>>, vector<8x256xf32>,
    %c0_i32_9 = arith.constant 0 : i32
    %10 = arith.cmpi eq, %arg2, %c0_i32_9 : i32
    %11 = arith.extui %10 : i1 to i32
    %c0_i32_10 = arith.constant 0 : i32
    %12 = arith.cmpi ne, %11, %c0_i32_10 : i32
    scf.if %12 {
      %c0_11 = arith.constant 0 : index
      %c0_12 = arith.constant 0 : index
      %13 = vector.load %arg7[%c0_11, %c0_12] : memref<8x256xf32, #tpu.memory_space<vmem>>, vector<8x256xf32>
      %c0_13 = arith.constant 0 : index
      %c0_14 = arith.constant 0 : index
      %14 = vector.load %arg5[%c0_13, %c0_14] : memref<8x1xf32, #tpu.memory_space<vmem>>, vector<8x1xf32>
      %15 = vector.broadcast %14 : vector<8x1xf32> to vector<8x256xf32>
      %16 = arith.addf %13, %15 : vector<8x256xf32>
      %cst_15 = arith.constant 5.000000e-01 : f32
      %17 = vector.broadcast %cst_15 : f32 to vector<8x256xf32>
      %18 = arith.mulf %17, %16 : vector<8x256xf32>
      %cst_16 = arith.constant 0.707106769 : f32
      %19 = vector.broadcast %cst_16 : f32 to vector<8x256xf32>
      %20 = arith.mulf %16, %19 : vector<8x256xf32>
      %21 = math.erf %20 : vector<8x256xf32>
      %cst_17 = arith.constant 1.000000e+00 : f32
      %22 = vector.broadcast %cst_17 : f32 to vector<8x256xf32>
      %23 = arith.addf %22, %21 : vector<8x256xf32>
      %24 = arith.mulf %18, %23 : vector<8x256xf32>
      %c0_18 = arith.constant 0 : index
      %c0_19 = arith.constant 0 : index
      %c0_20 = arith.constant 0 : index
      %25 = vector.load %arg6[%c0_18, %c0_19, %c0_20] : memref<1x8x256xf32, #tpu.memory_space<vmem>>, vector<1x8x256xf32>
      %26 = vector.shape_cast %25 : vector<1x8x256xf32> to vector<8x256xf32>
      %27 = vector.shape_cast %24 : vector<8x256xf32> to vector<1x8x256xf32>
      tpu.vector_store %arg6[%c0_18, %c0_19, %c0_20], %27 {strides = array<i32>} : memref<1x8x256xf32, #tpu.memory_space<vmem>>, vector<1x8x256xf32>,
    } else {
    }
    return
  }
  func.func @transform_0(%arg0: i32, %arg1: i32, %arg2: i32) -> (i32, i32, i32) {
    %c0_i32 = arith.constant 0 : i32
    return %arg0, %arg2, %arg1 : i32, i32, i32
  }
  func.func @transform_1(%arg0: i32, %arg1: i32, %arg2: i32) -> (i32, i32) {
    %c0_i32 = arith.constant 0 : i32
    %c0_i32_0 = arith.constant 0 : i32
    return %c0_i32, %arg2 : i32, i32
  }
  func.func @transform_2(%arg0: i32, %arg1: i32, %arg2: i32) -> (i32, i32) {
    %c0_i32 = arith.constant 0 : i32
    %c0_i32_0 = arith.constant 0 : i32
    %c0_i32_1 = arith.constant 0 : i32
    return %c0_i32, %c0_i32_0 : i32, i32
  }
  func.func @transform_3(%arg0: i32, %arg1: i32, %arg2: i32) -> (i32, i32, i32) {
    %c0_i32 = arith.constant 0 : i32
    %c0_i32_0 = arith.constant 0 : i32
    return %arg0, %c0_i32, %arg1 : i32, i32, i32
  }
}

</mosaic_0001>

<llo_original>
// kernel: tpu_custom_call.1
$region0: #{tpu_custom_call.1}
  #allocation0 [shape = 'u32[]', space=smem, size = 0x4, offset = 0x4, fixed_abs, tag = 'smem constant byte address 0x4 - core index']
  #allocation1 [shape = 'u32[144,128]{1,0:T(1,128)}', space=vmem, size = 0x12000, scoped, tag = 'internal scratch']
  #allocation2 [shape = 'f32[8,256]{1,0:T(8,128)}', space=vmem, size = 0x2000, scoped, tag = 'scratch operand']
  %s0 = inlined_call_operand.vmem [shape: f32[2,4,256], index: 0, kind: input, shape index: {}]
  %s1 = inlined_call_operand.vmem [shape: f32[8,4], index: 1, kind: input, shape index: {}]
  %s2 = inlined_call_operand.vmem [shape: f32[8,1], index: 2, kind: input, shape index: {}]
  %s3 = inlined_call_operand.hbm [shape: f32[2,8,256], index: 3, kind: output, shape index: {}]
  %s4 = sld [smem:[#allocation0]]
  $region53: #{tpu_custom_call.1} parent=0
    _
  %s6 = ssub.s32 1, %s4
  %s7 = scalar_select 0, %s6, %s4
  $region1: #{tpu_custom_call.1} parent=0
    #allocation3 [shape = 'u8[16384]{0}', space=vmem, size = 0x4000, scoped, tag = 'output window, operand 0']
    #allocation4 [shape = 's32[2]{0}', space=sflag, size = 0x8, scoped, tag = 'scoped memory for tpu_custom_call.1']
    %8 = vsyncpa [#allocation4], 0
    %s9 = scalar_lea.sflag [#allocation4], 1
    %10 = vsyncpa %s9, 0
    loop: start=0, step=1, limit=4
    $region2: #{tpu_custom_call.1} parent=1 // loop_pre_header
      _
    $region3: #{tpu_custom_call.1} parent=1 // loop_header
      %s12 = sphi 0, %s16
      %p13 = scmp.ge.s32.totalorder %s12, 4
      %s19 = sphi 0, %s38
      %s20 = sphi 0, %s34
      %s21 = sphi 0, %s30
      %s22 = sphi 0, %s19
      %s23 = sphi 0, %s20
      %s24 = sphi 0, %s21
      %s25 = sphi 0, %s22
      %s26 = sphi 0, %s23
      %s27 = sphi 0, %s24
      %s45 = sphi 0, %s47
      %s48 = sphi 0, %s45
      %s49 = sphi 0, %s48
      %s65 = sphi 0, %s49
      %s71 = sphi 0, %s73
      %s74 = sphi 0, %s71
      %s75 = sphi 0, %s74
      %s91 = sphi 0, %s75
      %s95 = sphi 0, %s95
      %s97 = sphi 0, %s95
      %s98 = sphi 0, %s97
      %s112 = sphi 0, %s98
      %s120 = sphi 0, %s122
      %s123 = sphi 0, %s120
      %s124 = sphi 0, %s123
      %s140 = sphi 0, %s124
    $region4: #{tpu_custom_call.1} parent=1 // loop_header_branch
      %15 = sbr.rel (%p13) target = $region8
    $region5: #{tpu_custom_call.1} parent=1 // loop_body
      %s17 = ssub.s32 %s12, 1
      %s18 = ssub.s32 %s12, 2
      %s28 = sadd.s32 1, %s21
      %p29 = scmp.ge.s32.totalorder %s28, 1
      %s30 = scalar_select %p29, 0, %s28
      %s31 = sadd.s32 1, %s20
      %s32 = scalar_select %p29, %s31, %s20
      %p33 = scmp.ge.s32.totalorder %s32, 1
      %s34 = scalar_select %p33, 0, %s32
      %s35 = sadd.s32 1, %s19
      %s36 = scalar_select %p33, %s35, %s19
      %p37 = scmp.ge.s32.totalorder %s36, 2
      %s38 = scalar_select %p37, 0, %s36
      %s39 = ssub.s32 %s19, %s38
      %s40 = ssub.s32 %s21, %s30
      %s41 = sor.u32 %s39, %s40
      %s42 = ssub.s32 %s20, %s34
      %s43 = sor.u32 %s41, %s42
      %p44 = scmp.eq.s32.totalorder %s43, 0
      %s46 = sadd.s32 %s45, 1
      %s47 = scalar_select %p44, %s45, %s46
      %p50 = pneg %p44
      %p51 = scmp.eq.s32.totalorder %s12, 1
      %p52 = por %p50, %p51
      %p53 = scmp.ne.s32.totalorder %s45, %s48
      %p54 = scmp.eq.s32.totalorder %s12, 0
      %p55 = por %p53, %p54
      %p56 = scmp.ne.s32.totalorder %s45, %s48
      %p57 = scmp.eq.s32.totalorder %s17, 1
      %p58 = por %p56, %p57
      %p59 = scmp.ne.s32.totalorder %s48, %s49
      %p60 = scmp.eq.s32.totalorder %s17, 0
      %p61 = por %p59, %p60
      %p62 = scmp.ne.s32.totalorder %s48, %s49
      %p63 = scmp.eq.s32.totalorder %s18, 1
      %p64 = por %p62, %p63
      %p66 = scmp.ne.s32.totalorder %s49, %s65
      %p67 = scmp.eq.s32.totalorder %s18, 0
      %p68 = por %p66, %p67
      %s69 = ssub.s32 %s21, %s30
      %p70 = scmp.eq.s32.totalorder %s69, 0
      %s72 = sadd.s32 %s71, 1
      %s73 = scalar_select %p70, %s71, %s72
      %p76 = pneg %p70
      %p77 = scmp.eq.s32.totalorder %s12, 1
      %p78 = por %p76, %p77
      %p79 = scmp.ne.s32.totalorder %s71, %s74
      %p80 = scmp.eq.s32.totalorder %s12, 0
      %p81 = por %p79, %p80
      %p82 = scmp.ne.s32.totalorder %s71, %s74
      %p83 = scmp.eq.s32.totalorder %s17, 1
      %p84 = por %p82, %p83
      %p85 = scmp.ne.s32.totalorder %s74, %s75
      %p86 = scmp.eq.s32.totalorder %s17, 0
      %p87 = por %p85, %p86
      %p88 = scmp.ne.s32.totalorder %s74, %s75
      %p89 = scmp.eq.s32.totalorder %s18, 1
      %p90 = por %p88, %p89
      %p92 = scmp.ne.s32.totalorder %s75, %s91
      %p93 = scmp.eq.s32.totalorder %s18, 0
      %p94 = por %p92, %p93
      %s96 = sadd.s32 %s95, 1
      %p99 = scmp.eq.s32.totalorder %s12, 1
      %p100 = scmp.ne.s32.totalorder %s95, %s97
      %p101 = scmp.eq.s32.totalorder %s12, 0
      %p102 = por %p100, %p101
      %p103 = scmp.ne.s32.totalorder %s95, %s97
      %p104 = scmp.eq.s32.totalorder %s17, 1
      %p105 = por %p103, %p104
      %p106 = scmp.ne.s32.totalorder %s97, %s98
      %p107 = scmp.eq.s32.totalorder %s17, 0
      %p108 = por %p106, %p107
      %p109 = scmp.ne.s32.totalorder %s97, %s98
      %p110 = scmp.eq.s32.totalorder %s18, 1
      %p111 = por %p109, %p110
      %p113 = scmp.ne.s32.totalorder %s98, %s112
      %p114 = scmp.eq.s32.totalorder %s18, 0
      %p115 = por %p113, %p114
      %s116 = ssub.s32 %s19, %s38
      %s117 = ssub.s32 %s20, %s34
      %s118 = sor.u32 %s116, %s117
      %p119 = scmp.eq.s32.totalorder %s118, 0
      %s121 = sadd.s32 %s120, 1
      %s122 = scalar_select %p119, %s120, %s121
      %p125 = pneg %p119
      %p126 = scmp.eq.s32.totalorder %s12, 1
      %p127 = por %p125, %p126
      %p128 = scmp.ne.s32.totalorder %s120, %s123
      %p129 = scmp.eq.s32.totalorder %s12, 0
      %p130 = por %p128, %p129
      %p131 = scmp.ne.s32.totalorder %s120, %s123
      %p132 = scmp.eq.s32.totalorder %s17, 1
      %p133 = por %p131, %p132
      %p134 = scmp.ne.s32.totalorder %s123, %s124
      %p135 = scmp.eq.s32.totalorder %s17, 0
      %p136 = por %p134, %p135
      %p137 = scmp.ne.s32.totalorder %s123, %s124
      %p138 = scmp.eq.s32.totalorder %s18, 1
      %p139 = por %p137, %p138
      %p141 = scmp.ne.s32.totalorder %s124, %s140
      %p142 = scmp.eq.s32.totalorder %s18, 0
      %p143 = por %p141, %p142
      %p144 = scmp.le.s32.totalorder 1, %s12
      %p145 = scmp.lt.s32.totalorder %s12, 3
      %p146 = pnand %p144, %p145
      %p147 = pneg %p146
      // Predicated region
      $region9: #{tpu_custom_call.1} parent=5 // pred_check
        _
      $region10: #{tpu_custom_call.1} parent=5 // pred_check_branch
        %149 = sbr.rel (%p146) target = $region12
      $region11: #{tpu_custom_call.1} parent=5 // pred_region
        %s150 = ssub.s32 %s12, 1
        // Predicated region
        $region13: #{tpu_custom_call.1} parent=11 // pred_check
          %p151 = pneg %p87
        $region14: #{tpu_custom_call.1} parent=11 // pred_check_branch
          %153 = sbr.rel (%p151) target = $region16
        $region15: #{tpu_custom_call.1} parent=11 // pred_region
          %p154 = scmp.lt.s32.totalorder %s24, 0
          %s155 = scalar_select %p154, %s24, 0
          %s156 = smul.addr %s155, 8
          %s157 = scalar_lea.vmem %s1, %s156
        $region16: #{tpu_custom_call.1} parent=11 // pred_fallthru
          _
        // Predicated region
        $region17: #{tpu_custom_call.1} parent=11 // pred_check
          %p158 = pneg %p108
        $region18: #{tpu_custom_call.1} parent=11 // pred_check_branch
          %160 = sbr.rel (%p158) target = $region20
        $region19: #{tpu_custom_call.1} parent=11 // pred_region
          _
        $region20: #{tpu_custom_call.1} parent=11 // pred_fallthru
          _
      $region12: #{tpu_custom_call.1} parent=5 // pred_fallthru
        _
      %p161 = scmp.lt.s32.totalorder %s12, 2
      // Predicated region
      $region21: #{tpu_custom_call.1} parent=5 // pred_check
        %p162 = pneg %p161
      $region22: #{tpu_custom_call.1} parent=5 // pred_check_branch
        %164 = sbr.rel (%p162) target = $region24
      $region23: #{tpu_custom_call.1} parent=5 // pred_region
        // Predicated region
        $region25: #{tpu_custom_call.1} parent=23 // pred_check
          %p165 = pneg %p55
        $region26: #{tpu_custom_call.1} parent=23 // pred_check_branch
          %167 = sbr.rel (%p165) target = $region28
        $region27: #{tpu_custom_call.1} parent=23 // pred_region
          %s168 = smul.u32 2, %s20
          %p169 = scmp.lt.s32.totalorder %s19, 1
          %s170 = scalar_select %p169, %s19, 1
          %p171 = scmp.lt.s32.totalorder %s21, 0
          %s172 = scalar_select %p171, %s21, 0
          %p173 = scmp.lt.s32.totalorder %s168, 1
          %s174 = scalar_select %p173, %s168, 1
          %s175 = smul.addr %s172, 2
          %s176 = sadd.s32 %s174, %s175
          %s177 = smul.addr %s170, 2
          %s178 = sadd.s32 %s176, %s177
          %s179 = smul.addr %s178, 4
          %s180 = scalar_lea.vmem %s0, %s179
          %s181 = smul.u32 2, %s20
        $region28: #{tpu_custom_call.1} parent=23 // pred_fallthru
          _
      $region24: #{tpu_custom_call.1} parent=5 // pred_fallthru
        _
      %p182 = scmp.le.s32.totalorder 1, %s12
      %p183 = scmp.lt.s32.totalorder %s12, 3
      %p184 = pnand %p182, %p183
      %p185 = pneg %p184
      // Predicated region
      $region29: #{tpu_custom_call.1} parent=5 // pred_check
        _
      $region30: #{tpu_custom_call.1} parent=5 // pred_check_branch
        %187 = sbr.rel (%p184) target = $region32
      $region31: #{tpu_custom_call.1} parent=5 // pred_region
        %s188 = ssub.s32 %s12, 1
        %s189 = smul.u32 2, %s23
        %p190 = scmp.lt.s32.totalorder %s22, 1
        %s191 = scalar_select %p190, %s22, 1
        %p192 = scmp.lt.s32.totalorder %s24, 0
        %s193 = scalar_select %p192, %s24, 0
        %p194 = scmp.lt.s32.totalorder %s189, 1
        %s195 = scalar_select %p194, %s189, 1
        %s196 = smul.addr %s193, 2
        %s197 = sadd.s32 %s195, %s196
        %s198 = smul.addr %s191, 2
        %s199 = sadd.s32 %s197, %s198
        %s200 = smul.addr %s199, 4
        %s201 = scalar_lea.vmem %s0, %s200
        %p202 = pneg %p61
        %p203 = pneg %p58
        %p204 = scmp.lt.s32.totalorder %s24, 0
        %s205 = scalar_select %p204, %s24, 0
        %s206 = smul.addr %s205, 8
        %s207 = scalar_lea.vmem %s1, %s206
        %p208 = pneg %p87
        %p209 = pneg %p84
        %p210 = pneg %p108
        %p211 = pneg %p105
        %p212 = pneg %p136
        %p213 = pneg %p133
        %s214 = sand.u32 %s123, 1
        %s215 = scalar_lea.sflag [#allocation4], %s214
        %s216 = sand.u32 %s123, 1
        %s217 = smul.addr %s216, 16
        %s218 = scalar_lea.vmem [#allocation3], %s217
        %s219 = smul.u32 2, %s23
        %p220 = scmp.lt.s32.totalorder %s22, 1
        %s221 = scalar_select %p220, %s22, 1
        %p222 = scmp.lt.s32.totalorder %s24, 0
        %s223 = scalar_select %p222, %s24, 0
        %p224 = scmp.lt.s32.totalorder %s219, 1
        %s225 = scalar_select %p224, %s219, 1
        %s226 = smul.addr %s223, 2
        %s227 = sadd.s32 %s225, %s226
        %s228 = smul.addr %s221, 2
        %s229 = sadd.s32 %s227, %s228
        %s230 = smul.addr %s229, 4
        %s231 = scalar_lea.vmem %s0, %s230
        %s232 = smul.u32 2, %s23
        %p233 = scmp.lt.s32.totalorder %s24, 0
        %s234 = scalar_select %p233, %s24, 0
        %s235 = smul.addr %s234, 8
        %s236 = scalar_lea.vmem %s1, %s235
        %s237 = smul.u32 2, %s23
        %p238 = scmp.eq.s32.totalorder %s24, 0
        // Predicated region
        $region33: #{tpu_custom_call.1} parent=31 // pred_check
          %p239 = pneg %p238
        $region34: #{tpu_custom_call.1} parent=31 // pred_check_branch
          %241 = sbr.rel (%p239) target = $region36
        $region35: #{tpu_custom_call.1} parent=31 // pred_region
          %242 = vst [vmem:[#allocation2] sm:$0xff] 0.0
          %243 = vst [vmem:[#allocation2 + $0x8] sm:$0xff] 0.0
        $region36: #{tpu_custom_call.1} parent=31 // pred_fallthru
          _
        %v244 = vld [vmem:[#allocation2] sm:$0xff]
        %v245 = vld [vmem:[#allocation2 + $0x8] sm:$0xff]
        %v246 = vld [vmem:[%s236] sm:$0xff]
        %v247 = vld [vmem:[%s231] sm:$0xff]
        %v249 = vcombine.high %v247, %v247
        %vm250 = vcmask 31744
        %v252 = vsel %vm250, %v246, 0
        %vm254 = vcmask 1043456
        %v255 = vsel %vm254, %v247, 0
        %v257 = vsel %vm254, %v249, 0
        %259 = vmatprep.subr.mxu0 %v257
        %260 = vmatpush1.msra.mxu0 %v255
        %261 = vmatprep.subr.mxu0 0.0
        %262 = vmatpush1.msra.mxu0 0.0
        %263 = vmatprep.subr.mxu0 0.0
        %264 = vmatpush1.msra.mxu0 0.0
        %265 = vmatprep.subr.mxu0 0.0
        %266 = vmatpush1.msra.mxu0 0.0
        %267 = vmatprep.subr.mxu0 0.0
        %268 = vmatpush1.msra.mxu0 0.0
        %269 = vmatprep.subr.mxu0 0.0
        %270 = vmatpush1.msra.mxu0 0.0
        %271 = vmatprep.subr.mxu0 0.0
        %272 = vmatpush1.msra.mxu0 0.0
        %273 = vmatprep.subr.mxu0 0.0
        %274 = vmatpush1.msra.mxu0 0.0
        %275 = vmatprep.subr.mxu0 0.0
        %276 = vmatpush1.msra.mxu0 0.0
        %277 = vmatprep.subr.mxu0 0.0
        %278 = vmatpush1.msra.mxu0 0.0
        %279 = vmatprep.subr.mxu0 0.0
        %280 = vmatpush1.msra.mxu0 0.0
        %281 = vmatprep.subr.mxu0 0.0
        %282 = vmatpush1.msra.mxu0 0.0
        %283 = vmatprep.subr.mxu0 0.0
        %284 = vmatpush1.msra.mxu0 0.0
        %285 = vmatprep.subr.mxu0 0.0
        %286 = vmatpush1.msra.mxu0 0.0
        %287 = vmatprep.subr.mxu0 0.0
        %288 = vmatpush1.msra.mxu0 0.0
        %289 = vmatprep.subr.mxu0 0.0
        %290 = vmatpush1.msra.mxu0 0.0
        %291 = vmatprep.subr.mxu0 0.0
        %292 = vmatpush1.msra.mxu0 0.0
        %293 = vmatprep.subr.mxu0 0.0
        %294 = vmatpush1.msra.mxu0 0.0
        %295 = vmatprep.subr.mxu0 0.0
        %296 = vmatpush1.msra.mxu0 0.0
        %297 = vmatprep.subr.mxu0 0.0
        %298 = vmatpush1.msra.mxu0 0.0
        %299 = vmatprep.subr.mxu0 0.0
        %300 = vmatpush1.msra.mxu0 0.0
        %301 = vmatprep.subr.mxu0 0.0
        %302 = vmatpush1.msra.mxu0 0.0
        %303 = vmatprep.subr.mxu0 0.0
        %304 = vmatpush1.msra.mxu0 0.0
        %305 = vmatprep.subr.mxu0 0.0
        %306 = vmatpush1.msra.mxu0 0.0
        %307 = vmatprep.subr.mxu0 0.0
        %308 = vmatpush1.msra.mxu0 0.0
        %309 = vmatprep.subr.mxu0 0.0
        %310 = vmatpush1.msra.mxu0 0.0
        %311 = vmatprep.subr.mxu0 0.0
        %312 = vmatpush1.msra.mxu0 0.0
        %313 = vmatprep.subr.mxu0 0.0
        %314 = vmatpush1.msra.mxu0 0.0
        %315 = vmatprep.subr.mxu0 0.0
        %316 = vmatpush1.msra.mxu0 0.0
        %317 = vmatprep.subr.mxu0 0.0
        %318 = vmatpush1.msra.mxu0 0.0
        %319 = vmatprep.subr.mxu0 0.0
        %320 = vmatpush1.msra.mxu0 0.0
        %321 = vmatprep.subr.mxu0 0.0
        %322 = vmatpush1.msra.mxu0 0.0
        %323 = vmatprep.mubr.f32.mxu0 0.0
        %324 = vmatmul.mubr.f32.gmra.mrb[0].mxu0 %v252
        %v325 = vpop.f32.mrb[0].mxu0
        %v326 = vadd.f32 0.0, %v325
        %v327 = vpop.f32.mrb[0].mxu0
        %v328 = vadd.f32 0.0, %v327
        %329 = vdwg.mxu0
        %v330 = vadd.f32 %v244, %v326
        %v331 = vadd.f32 %v245, %v328
        %332 = vst [vmem:[#allocation2] sm:$0xff] %v330
        %333 = vst [vmem:[#allocation2 + $0x8] sm:$0xff] %v331
        // Predicated region
        $region37: #{tpu_custom_call.1} parent=31 // pred_check
          %p334 = pneg %p238
        $region38: #{tpu_custom_call.1} parent=31 // pred_check_branch
          %336 = sbr.rel (%p334) target = $region40
        $region39: #{tpu_custom_call.1} parent=31 // pred_region
          %v337 = vld [vmem:[#allocation2] sm:$0xff]
          %v338 = vld [vmem:[#allocation2 + $0x8] sm:$0xff]
          %v339 = vld [vmem:[%s2] sm:$0xff]
          %341 = vset.pattern.permute.xlu0 0
          %342 = vperm.xlu0 %341, %v339
          %v343 = vpop.permute.xlu0 %342
          %v345 = vadd.f32 %v337, %v343
          %v346 = vadd.f32 %v338, %v343
          %v347 = vmul.f32 %v345, 0.5
          %v348 = vmul.f32 %v346, 0.5
          %v349 = vmul.f32 %v345, 0.70710677
          %v350 = vmul.f32 %v346, 0.70710677
          %v351 = verf.f32.pop %v349
          %v352 = verf.f32.pop %v350
          %v353 = vadd.f32 %v351, 1.0
          %v354 = vadd.f32 %v352, 1.0
          %v355 = vmul.f32 %v347, %v353
          %v356 = vmul.f32 %v348, %v354
          %357 = vst [vmem:[%s218] sm:$0xff] %v355
          %358 = vst [vmem:[%s218 + $0x8] sm:$0xff] %v356
        $region40: #{tpu_custom_call.1} parent=31 // pred_fallthru
          _
        %s359 = sand.u32 %s123, 1
        %s360 = scalar_lea.sflag [#allocation4], %s359
        %s361 = sand.u32 %s123, 1
        %s362 = smul.addr %s361, 16
        %s363 = scalar_lea.vmem [#allocation3], %s362
        // Predicated region
        $region41: #{tpu_custom_call.1} parent=31 // pred_check
          %p364 = pneg %p133
        $region42: #{tpu_custom_call.1} parent=31 // pred_check_branch
          %366 = sbr.rel (%p364) target = $region44
        $region43: #{tpu_custom_call.1} parent=31 // pred_region
          %s367 = smul.u32 2, %s23
          %s369 = ssub.s32 256, 256
          %370 = vsyncadd %s360, %s369
          %s371 = smul.addr %s22, 2
          %s372 = sadd.s32 %s367, %s371
          %s373 = smul.addr %s372, 128
          %s374 = scalar_lea.hbm %s3, %s373
          %s376 = sshll.u32 %s363, 4
          %s377 = int_to_ptr.vmem [resolvable:$true] %s376
          %379 = dma.vmem_to_hbm [thread:$0]  %s377, 256, %s374, %s360
        $region44: #{tpu_custom_call.1} parent=31 // pred_fallthru
          _
      $region32: #{tpu_custom_call.1} parent=5 // pred_fallthru
        _
      %p380 = scmp.le.s32.totalorder 2, %s12
      // Predicated region
      $region45: #{tpu_custom_call.1} parent=5 // pred_check
        %p381 = pneg %p380
      $region46: #{tpu_custom_call.1} parent=5 // pred_check_branch
        %383 = sbr.rel (%p381) target = $region48
      $region47: #{tpu_custom_call.1} parent=5 // pred_region
        %s384 = ssub.s32 %s12, 2
        // Predicated region
        $region49: #{tpu_custom_call.1} parent=47 // pred_check
          %p385 = pneg %p139
        $region50: #{tpu_custom_call.1} parent=47 // pred_check_branch
          %387 = sbr.rel (%p385) target = $region52
        $region51: #{tpu_custom_call.1} parent=47 // pred_region
          %s388 = sand.u32 %s124, 1
          %s389 = scalar_lea.sflag [#allocation4], %s388
          %s390 = sand.u32 %s124, 1
          %s391 = smul.addr %s390, 16
          %s392 = scalar_lea.vmem [#allocation3], %s391
          %393 = dma.done %s389, 256
        $region52: #{tpu_custom_call.1} parent=47 // pred_fallthru
          _
      $region48: #{tpu_custom_call.1} parent=5 // pred_fallthru
        _
    $region6: #{tpu_custom_call.1} parent=1 // loop_footer
      %s16 = sadd.s32 1, %s12
    $region7: #{tpu_custom_call.1} parent=1 // loop_footer_branch
      %11 = sbr.rel target = $region3
    $region8: #{tpu_custom_call.1} parent=1 // loop_exit
      _
    %394 = vsyncpa [#allocation4], 1
    %s395 = scalar_lea.sflag [#allocation4], 1
    %396 = vsyncpa %s395, 1

</llo_original>
